<compile_context>
chip_gen: v5e
topology: v5e:2x2
jax: 0.10.0
libtpu: 0.0.40
codegen_flags: <defaults>
</compile_context>

<pallas_src>
import functools

import jax
import jax.numpy as jnp
from jax.experimental import pallas as pl
from jax.experimental.pallas import tpu as pltpu


_NEG_FILL = -1e30  # finite "minus infinity" -> exp underflows to exactly 0, no NaNs


def _moco_partial_lse_kernel(q_ref, k_ref, mem_ref, pos_out_ref, lse_out_ref,
                             qn_ref, pos_ref, m_ref, l_ref,
                             *, normalize, inv_temperature, k_actual, block_k,
                             steps_per_core, masked):
    c = pl.program_id(0)          # core split of the K reduction (parallel)
    k = pl.program_id(1)          # K-tile stream within this core (arbitrary)
    inv_t = jnp.float32(inv_temperature)
    neg_fill = jnp.float32(_NEG_FILL)

    # ---- K-invariant init (per core): normalize q/k, positive logit, (m, l). ----
    @pl.when(k == 0)
    def _init():
        q = q_ref[...].astype(jnp.float32)                     # (bs, d)
        kk = k_ref[...].astype(jnp.float32)                    # (bs, d)
        if normalize:
            eps2 = jnp.float32(1e-24)                          # (1e-12)^2
            q = q * jax.lax.rsqrt(
                jnp.maximum(jnp.sum(q * q, axis=-1, keepdims=True), eps2))
            kk = kk * jax.lax.rsqrt(
                jnp.maximum(jnp.sum(kk * kk, axis=-1, keepdims=True), eps2))
        # Fold 1/temperature into the cached query: scales both pos and neg logits.
        q = q * inv_t
        pos_ref[...] = jnp.sum(q * kk, axis=-1, keepdims=True)  # (bs, 1) f32
        qn_ref[...] = q.astype(jnp.bfloat16)                    # cached for MXU
        # Negatives-only online logsumexp seed (finite sentinel, not -inf).
        m_ref[...] = jnp.full_like(m_ref, neg_fill)
        l_ref[...] = jnp.zeros_like(l_ref)

    # ---- Per-tile streaming work: bf16 NT MXU matmul + online (m, l) update. ----
    neg = jax.lax.dot_general(
        qn_ref[...], mem_ref[...],                              # bf16 x bf16
        dimension_numbers=(((1,), (1,)), ((), ())),             # contract feature dims
        preferred_element_type=jnp.float32)                     # (bs, TK) f32

    if masked:
        # Mask queue rows past the true K (HBM padding) with a finite fill.
        base = (c * steps_per_core + k) * block_k
        limit = k_actual - base                                 # int32 scalar
        col = jax.lax.broadcasted_iota(jnp.int32, (1, block_k), 1)
        neg = jnp.where(col < limit, neg, neg_fill)

    m_prev = m_ref[...]
    m_new = jnp.maximum(m_prev, jnp.max(neg, axis=-1, keepdims=True))
    l_ref[...] = jnp.exp(m_prev - m_new) * l_ref[...] + jnp.sum(
        jnp.exp(neg - m_new), axis=-1, keepdims=True)
    m_ref[...] = m_new

    # ---- Finalize: emit this core's partial (negatives-only) LSE and pos. ----
    @pl.when(k == pl.num_programs(1) - 1)
    def _finalize():
        pos_out_ref[0] = pos_ref[...]
        lse_out_ref[0] = m_ref[...] + jnp.log(l_ref[...])


def _round_up(x, m):
    return ((x + m - 1) // m) * m


def _cdiv(a, b):
    return (a + b - 1) // b


def _pick_block_k(K, d, *, num_cores, elem_bytes=2, block_k=None,
                  stream_budget_bytes=8 << 20, max_tk=4096):
    """Pick a K tile: MXU-aligned (mult. of 256 by default, >= mult. of 16),
    bounded by a double-buffered-stream VMEM budget, never a full-K fallback.
    Returns (tk, k_padded) with k_padded a multiple of num_cores * tk."""
    per_core = _cdiv(K, num_cores)
    if block_k is not None:
        tk = _round_up(int(block_k), 16)
        tk = min(tk, _round_up(per_core, 16))
    else:
        cap = (stream_budget_bytes // (2 * d * elem_bytes)) // 256 * 256
        cap = max(cap, 256)
        tk = max(256, min(_round_up(per_core, 256), cap, max_tk))
    k_pad = _round_up(K, num_cores * tk)
    return tk, k_pad


def moco_loss(query, keys, memory_vectors, normalize=True, temperature=1.0,
              block_k=None, num_cores=2):
    bs, d = query.shape
    K, d2 = memory_vectors.shape
    assert d == d2 and keys.shape == (bs, d)
    assert num_cores >= 1

    # Stream the queue in bf16. In a real MoCo loop the queue itself would live
    # in bf16 in HBM; here we cast once in the wrapper if needed.
    mem = memory_vectors
    if mem.dtype != jnp.bfloat16:
        mem = mem.astype(jnp.bfloat16)

    tk, k_pad = _pick_block_k(K, d, num_cores=num_cores, block_k=block_k)
    if k_pad != K:
        mem = jnp.pad(mem, ((0, k_pad - K), (0, 0)))
    steps_per_core = k_pad // (num_cores * tk)

    kernel = functools.partial(
        _moco_partial_lse_kernel,
        normalize=normalize,
        inv_temperature=1.0 / float(temperature),
        k_actual=K,
        block_k=tk,
        steps_per_core=steps_per_core,
        masked=(k_pad != K),
    )

    # VMEM budget: double-buffered bf16 queue stream + residents + scratch.
    vmem_est = (2 * tk * d * 2                # streamed queue, double-buffered
                + 2 * 2 * bs * d * 4          # query/keys residents
                + bs * d * 2 + 3 * bs * 4     # qn / pos / m / l scratch
                + 4 * num_cores * bs * 4)     # tiny outputs
    vmem_limit = int(min(max(2 * vmem_est + (2 << 20), 8 << 20), 48 << 20))

    cost = pl.CostEstimate(
        flops=2 * bs * d * k_pad + 8 * bs * d,
        transcendentals=bs * k_pad,
        bytes_accessed=k_pad * d * 2 + 2 * bs * d * 4 + 2 * num_cores * bs * 4,
    )

    pos_out, lse_out = pl.pallas_call(
        kernel,
        out_shape=(
            jax.ShapeDtypeStruct((num_cores, bs, 1), jnp.float32),  # pos (per core copy)
            jax.ShapeDtypeStruct((num_cores, bs, 1), jnp.float32),  # partial neg-LSE
        ),
        grid_spec=pltpu.PrefetchScalarGridSpec(
            num_scalar_prefetch=0,
            grid=(num_cores, steps_per_core),
            in_specs=[
                pl.BlockSpec((bs, d), lambda c, k: (0, 0)),     # query: resident
                pl.BlockSpec((bs, d), lambda c, k: (0, 0)),     # keys:  resident
                pl.BlockSpec((tk, d),
                             lambda c, k: (c * steps_per_core + k, 0)),  # queue stream
            ],
            out_specs=(
                pl.BlockSpec((1, bs, 1), lambda c, k: (c, 0, 0)),
                pl.BlockSpec((1, bs, 1), lambda c, k: (c, 0, 0)),
            ),
            scratch_shapes=[
                pltpu.VMEM((bs, d), jnp.bfloat16),   # cached q * (1/T), bf16
                pltpu.VMEM((bs, 1), jnp.float32),    # pos logit
                pltpu.VMEM((bs, 1), jnp.float32),    # running max m
                pltpu.VMEM((bs, 1), jnp.float32),    # running sum l
            ],
        ),
        compiler_params=pltpu.CompilerParams(
            dimension_semantics=("parallel", "arbitrary"),
            vmem_limit_bytes=vmem_limit),
        cost_estimate=cost,
    )(query, keys, mem)

    # Tiny merge ((num_cores + 1) * bs elements) in plain JAX:
    #   full LSE per row = logsumexp([pos, lse_core0, lse_core1, ...]).
    pos = pos_out[0]                                       # (bs, 1)
    terms = jnp.concatenate([pos[None], lse_out], axis=0)  # (1+num_cores, bs, 1)
    full_lse = jax.scipy.special.logsumexp(terms, axis=0)  # (bs, 1)
    return jnp.mean(full_lse - pos)


# ---------------------------------------------------------------------------
# References for testing.
# ---------------------------------------------------------------------------
def moco_loss_ref(query, keys, memory_vectors, normalize=True, temperature=1.0):
    """Pure-JAX f32 reference mirroring the PyTorch forward exactly."""
    q = query.astype(jnp.float32)
    k = keys.astype(jnp.float32)
    mem = memory_vectors.astype(jnp.float32)
    if normalize:
        q = q / jnp.maximum(jnp.linalg.norm(q, axis=-1, keepdims=True), 1e-12)
        k = k / jnp.maximum(jnp.linalg.norm(k, axis=-1, keepdims=True), 1e-12)
    pos = jnp.sum(q * k, axis=-1, keepdims=True) / temperature
    neg = (q @ mem.T) / temperature
    logits = jnp.concatenate([pos, neg], axis=1)
    lse = jax.scipy.special.logsumexp(logits, axis=-1)
    return jnp.mean(lse - logits[:, 0])


def moco_loss_emulated(query, keys, memory_vectors, normalize=True, temperature=1.0):
    """Pure-JAX emulation of the kernel's numerics (rsqrt norm, 1/T folded into
    q before the bf16 cast, bf16 MXU negatives, f32 positive)."""
    q = query.astype(jnp.float32)
    k = keys.astype(jnp.float32)
    if normalize:
        eps2 = jnp.float32(1e-24)
        q = q * jax.lax.rsqrt(jnp.maximum(jnp.sum(q * q, -1, keepdims=True), eps2))
        k = k * jax.lax.rsqrt(jnp.maximum(jnp.sum(k * k, -1, keepdims=True), eps2))
    q = q * jnp.float32(1.0 / temperature)
    pos = jnp.sum(q * k, axis=-1, keepdims=True)
    neg = jax.lax.dot_general(
        q.astype(jnp.bfloat16), memory_vectors.astype(jnp.bfloat16),
        dimension_numbers=(((1,), (1,)), ((), ())),
        preferred_element_type=jnp.float32)
    logits = jnp.concatenate([pos, neg], axis=1)
    lse = jax.scipy.special.logsumexp(logits, axis=-1)
    return jnp.mean(lse - logits[:, 0])


if __name__ == "__main__":
    key = jax.random.PRNGKey(0)
    k1, k2, k3 = jax.random.split(key, 3)

    bs, d = 8, 128
    temperature = 0.5
    query = jax.random.normal(k1, (bs, d), dtype=jnp.float32)
    keys = jax.random.normal(k2, (bs, d), dtype=jnp.float32)

    # Case 1: K divisible by the tile -> multi-step streaming, no masking.
    K1 = 1024
    mem1 = jax.random.normal(k3, (K1, d), dtype=jnp.float32)
    loss1 = jax.block_until_ready(
        moco_loss(query, keys, mem1, normalize=True, temperature=temperature,
                  block_k=256))
    emu1 = moco_loss_emulated(query, keys, mem1, True, temperature)
    ref1 = moco_loss_ref(query, keys, mem1, True, temperature)
    assert jnp.allclose(loss1, emu1, atol=1e-4, rtol=1e-4), (loss1, emu1)
    assert jnp.allclose(loss1, ref1, atol=5e-2, rtol=2e-2), (loss1, ref1)

    # Case 2: ragged K -> HBM padding + in-kernel masking of the last tile.
    K2 = 1000
    mem2 = mem1[:K2]
    loss2 = jax.block_until_ready(
        moco_loss(query, keys, mem2, normalize=True, temperature=temperature,
                  block_k=256))
    emu2 = moco_loss_emulated(query, keys, mem2, True, temperature)
    assert jnp.allclose(loss2, emu2, atol=1e-4, rtol=1e-4), (loss2, emu2)

    # Case 3: default (budget-aware) tile selection, normalize=False path.
    loss3 = jax.block_until_ready(
        moco_loss(query, keys, mem1, normalize=False, temperature=1.0))
    emu3 = moco_loss_emulated(query, keys, mem1, False, 1.0)
    assert jnp.allclose(loss3, emu3, atol=1e-3, rtol=1e-3), (loss3, emu3)

    print("KERNEL_OK")
</pallas_src>

<mosaic_0001>
module attributes {stable_mosaic.version = 11 : i64} {
  func.func @_moco_partial_lse_kernel(%arg0: i32, %arg1: i32, %arg2: memref<8x128xf32, #tpu.memory_space<vmem>>, %arg3: memref<8x128xf32, #tpu.memory_space<vmem>>, %arg4: memref<256x128xbf16, #tpu.memory_space<vmem>>, %arg5: memref<1x8x1xf32, #tpu.memory_space<vmem>>, %arg6: memref<1x8x1xf32, #tpu.memory_space<vmem>>, %arg7: memref<8x128xbf16, #tpu.memory_space<vmem>>, %arg8: memref<8x1xf32, #tpu.memory_space<vmem>>, %arg9: memref<8x1xf32, #tpu.memory_space<vmem>>, %arg10: memref<8x1xf32, #tpu.memory_space<vmem>>) attributes {dimension_semantics = [#tpu.dimension_semantics<parallel>, #tpu.dimension_semantics<arbitrary>], iteration_bounds = array<i64: 2, 2>, scalar_prefetch = 0 : i64, scratch_operands = 4 : i64, tpu.core_type = #tpu.core_type<tc>, window_params = [{pipeline_mode = #tpu.pipeline_mode<synchronous>, transform_indices = @transform_0, window_bounds = array<i64: 8, 128>}, {pipeline_mode = #tpu.pipeline_mode<synchronous>, transform_indices = @transform_1, window_bounds = array<i64: 8, 128>}, {transform_indices = @transform_2, window_bounds = array<i64: 256, 128>}, {transform_indices = @transform_3, window_bounds = array<i64: 1, 8, 1>}, {transform_indices = @transform_4, window_bounds = array<i64: 1, 8, 1>}]} {
    %c0_i32 = arith.constant 0 : i32
    %0 = arith.cmpi eq, %arg1, %c0_i32 : i32
    %1 = arith.extui %0 : i1 to i32
    %cst = arith.constant 2.000000e+00 : f32
    %cst_0 = arith.constant -1.000000e+30 : f32
    %c0_i32_1 = arith.constant 0 : i32
    %2 = arith.cmpi ne, %1, %c0_i32_1 : i32
    scf.if %2 {
      %c0_17 = arith.constant 0 : index
      %c0_18 = arith.constant 0 : index
      %25 = vector.load %arg2[%c0_17, %c0_18] : memref<8x128xf32, #tpu.memory_space<vmem>>, vector<8x128xf32>
      %c0_19 = arith.constant 0 : index
      %c0_20 = arith.constant 0 : index
      %26 = vector.load %arg3[%c0_19, %c0_20] : memref<8x128xf32, #tpu.memory_space<vmem>>, vector<8x128xf32>
      %27 = arith.mulf %25, %25 : vector<8x128xf32>
      %cst_21 = arith.constant dense<0.000000e+00> : vector<8xf32>
      %28 = vector.multi_reduction <add>, %27, %cst_21 [1] : vector<8x128xf32> to vector<8xf32>
      %29 = vector.shape_cast %28 : vector<8xf32> to vector<8x1xf32>
      %cst_22 = arith.constant 1.000000e-24 : f32
      %30 = vector.broadcast %cst_22 : f32 to vector<8x1xf32>
      %31 = arith.maximumf %29, %30 : vector<8x1xf32>
      %32 = math.rsqrt %31 : vector<8x1xf32>
      %33 = vector.broadcast %32 : vector<8x1xf32> to vector<8x128xf32>
      %34 = arith.mulf %25, %33 : vector<8x128xf32>
      %35 = arith.mulf %26, %26 : vector<8x128xf32>
      %cst_23 = arith.constant dense<0.000000e+00> : vector<8xf32>
      %36 = vector.multi_reduction <add>, %35, %cst_23 [1] : vector<8x128xf32> to vector<8xf32>
      %37 = vector.shape_cast %36 : vector<8xf32> to vector<8x1xf32>
      %cst_24 = arith.constant 1.000000e-24 : f32
      %38 = vector.broadcast %cst_24 : f32 to vector<8x1xf32>
      %39 = arith.maximumf %37, %38 : vector<8x1xf32>
      %40 = math.rsqrt %39 : vector<8x1xf32>
      %41 = vector.broadcast %40 : vector<8x1xf32> to vector<8x128xf32>
      %42 = arith.mulf %26, %41 : vector<8x128xf32>
      %43 = vector.broadcast %cst : f32 to vector<8x128xf32>
      %44 = arith.mulf %34, %43 : vector<8x128xf32>
      %45 = arith.mulf %44, %42 : vector<8x128xf32>
      %cst_25 = arith.constant dense<0.000000e+00> : vector<8xf32>
      %46 = vector.multi_reduction <add>, %45, %cst_25 [1] : vector<8x128xf32> to vector<8xf32>
      %47 = vector.shape_cast %46 : vector<8xf32> to vector<8x1xf32>
      %c0_26 = arith.constant 0 : index
      %c0_27 = arith.constant 0 : index
      %48 = vector.load %arg8[%c0_26, %c0_27] : memref<8x1xf32, #tpu.memory_space<vmem>>, vector<8x1xf32>
      tpu.vector_store %arg8[%c0_26, %c0_27], %47 {strides = array<i32>} : memref<8x1xf32, #tpu.memory_space<vmem>>, vector<8x1xf32>,
      %49 = arith.truncf %44 : vector<8x128xf32> to vector<8x128xbf16>
      %c0_28 = arith.constant 0 : index
      %c0_29 = arith.constant 0 : index
      %50 = vector.load %arg7[%c0_28, %c0_29] : memref<8x128xbf16, #tpu.memory_space<vmem>>, vector<8x128xbf16>
      tpu.vector_store %arg7[%c0_28, %c0_29], %49 {strides = array<i32>} : memref<8x128xbf16, #tpu.memory_space<vmem>>, vector<8x128xbf16>,
      %51 = vector.broadcast %cst_0 : f32 to vector<8x1xf32>
      %c0_30 = arith.constant 0 : index
      %c0_31 = arith.constant 0 : index
      %52 = vector.load %arg9[%c0_30, %c0_31] : memref<8x1xf32, #tpu.memory_space<vmem>>, vector<8x1xf32>
      tpu.vector_store %arg9[%c0_30, %c0_31], %51 {strides = array<i32>} : memref<8x1xf32, #tpu.memory_space<vmem>>, vector<8x1xf32>,
      %cst_32 = arith.constant 0.000000e+00 : f32
      %53 = vector.broadcast %cst_32 : f32 to vector<8x1xf32>
      %c0_33 = arith.constant 0 : index
      %c0_34 = arith.constant 0 : index
      %54 = vector.load %arg10[%c0_33, %c0_34] : memref<8x1xf32, #tpu.memory_space<vmem>>, vector<8x1xf32>
      tpu.vector_store %arg10[%c0_33, %c0_34], %53 {strides = array<i32>} : memref<8x1xf32, #tpu.memory_space<vmem>>, vector<8x1xf32>,
    } else {
    }
    %c0 = arith.constant 0 : index
    %c0_2 = arith.constant 0 : index
    %3 = vector.load %arg7[%c0, %c0_2] : memref<8x128xbf16, #tpu.memory_space<vmem>>, vector<8x128xbf16>
    %c0_3 = arith.constant 0 : index
    %c0_4 = arith.constant 0 : index
    %4 = vector.load %arg4[%c0_3, %c0_4] : memref<256x128xbf16, #tpu.memory_space<vmem>>, vector<256x128xbf16>
    %cst_5 = arith.constant dense<0.000000e+00> : vector<8x256xf32>
    %5 = tpu.matmul %3, %4, %cst_5 {dimension_numbers = #tpu.dot_dimension_numbers<[1], [1], [0], [0], [0, 0, 1, 0], [], []>} : vector<8x128xbf16>, vector<256x128xbf16>, vector<8x256xf32> -> vector<8x256xf32>
    %c0_6 = arith.constant 0 : index
    %c0_7 = arith.constant 0 : index
    %6 = vector.load %arg9[%c0_6, %c0_7] : memref<8x1xf32, #tpu.memory_space<vmem>>, vector<8x1xf32>
    %cst_8 = arith.constant dense<0xFF800000> : vector<8xf32>
    %7 = vector.multi_reduction <maximumf>, %5, %cst_8 [1] : vector<8x256xf32> to vector<8xf32>
    %8 = vector.shape_cast %7 : vector<8xf32> to vector<8x1xf32>
    %9 = arith.maximumf %6, %8 : vector<8x1xf32>
    %10 = arith.subf %6, %9 : vector<8x1xf32>
    %11 = math.exp %10 : vector<8x1xf32>
    %c0_9 = arith.constant 0 : index
    %c0_10 = arith.constant 0 : index
    %12 = vector.load %arg10[%c0_9, %c0_10] : memref<8x1xf32, #tpu.memory_space<vmem>>, vector<8x1xf32>
    %13 = arith.mulf %11, %12 : vector<8x1xf32>
    %14 = vector.broadcast %9 : vector<8x1xf32> to vector<8x256xf32>
    %15 = arith.subf %5, %14 : vector<8x256xf32>
    %16 = math.exp %15 : vector<8x256xf32>
    %cst_11 = arith.constant dense<0.000000e+00> : vector<8xf32>
    %17 = vector.multi_reduction <add>, %16, %cst_11 [1] : vector<8x256xf32> to vector<8xf32>
    %18 = vector.shape_cast %17 : vector<8xf32> to vector<8x1xf32>
    %19 = arith.addf %13, %18 : vector<8x1xf32>
    %c0_12 = arith.constant 0 : index
    %c0_13 = arith.constant 0 : index
    %20 = vector.load %arg10[%c0_12, %c0_13] : memref<8x1xf32, #tpu.memory_space<vmem>>, vector<8x1xf32>
    tpu.vector_store %arg10[%c0_12, %c0_13], %19 {strides = array<i32>} : memref<8x1xf32, #tpu.memory_space<vmem>>, vector<8x1xf32>,
    %c0_14 = arith.constant 0 : index
    %c0_15 = arith.constant 0 : index
    %21 = vector.load %arg9[%c0_14, %c0_15] : memref<8x1xf32, #tpu.memory_space<vmem>>, vector<8x1xf32>
    tpu.vector_store %arg9[%c0_14, %c0_15], %9 {strides = array<i32>} : memref<8x1xf32, #tpu.memory_space<vmem>>, vector<8x1xf32>,
    %c1_i32 = arith.constant 1 : i32
    %22 = arith.cmpi eq, %arg1, %c1_i32 : i32
    %23 = arith.extui %22 : i1 to i32
    %c0_i32_16 = arith.constant 0 : i32
    %24 = arith.cmpi ne, %23, %c0_i32_16 : i32
    scf.if %24 {
      %c0_17 = arith.constant 0 : index
      %c0_18 = arith.constant 0 : index
      %25 = vector.load %arg8[%c0_17, %c0_18] : memref<8x1xf32, #tpu.memory_space<vmem>>, vector<8x1xf32>
      %c0_19 = arith.constant 0 : index
      %c0_20 = arith.constant 0 : index
      %c0_21 = arith.constant 0 : index
      %26 = vector.load %arg5[%c0_19, %c0_20, %c0_21] : memref<1x8x1xf32, #tpu.memory_space<vmem>>, vector<1x8x1xf32>
      %27 = vector.shape_cast %26 : vector<1x8x1xf32> to vector<8x1xf32>
      %28 = vector.shape_cast %25 : vector<8x1xf32> to vector<1x8x1xf32>
      tpu.vector_store %arg5[%c0_19, %c0_20, %c0_21], %28 {strides = array<i32>} : memref<1x8x1xf32, #tpu.memory_space<vmem>>, vector<1x8x1xf32>,
      %c0_22 = arith.constant 0 : index
      %c0_23 = arith.constant 0 : index
      %29 = vector.load %arg9[%c0_22, %c0_23] : memref<8x1xf32, #tpu.memory_space<vmem>>, vector<8x1xf32>
      %c0_24 = arith.constant 0 : index
      %c0_25 = arith.constant 0 : index
      %30 = vector.load %arg10[%c0_24, %c0_25] : memref<8x1xf32, #tpu.memory_space<vmem>>, vector<8x1xf32>
      %31 = math.log %30 : vector<8x1xf32>
      %32 = arith.addf %29, %31 : vector<8x1xf32>
      %c0_26 = arith.constant 0 : index
      %c0_27 = arith.constant 0 : index
      %c0_28 = arith.constant 0 : index
      %33 = vector.load %arg6[%c0_26, %c0_27, %c0_28] : memref<1x8x1xf32, #tpu.memory_space<vmem>>, vector<1x8x1xf32>
      %34 = vector.shape_cast %33 : vector<1x8x1xf32> to vector<8x1xf32>
      %35 = vector.shape_cast %32 : vector<8x1xf32> to vector<1x8x1xf32>
      tpu.vector_store %arg6[%c0_26, %c0_27, %c0_28], %35 {strides = array<i32>} : memref<1x8x1xf32, #tpu.memory_space<vmem>>, vector<1x8x1xf32>,
    } else {
    }
    return
  }
  func.func @transform_0(%arg0: i32, %arg1: i32) -> (i32, i32) {
    %c0_i32 = arith.constant 0 : i32
    %c0_i32_0 = arith.constant 0 : i32
    %c0_i32_1 = arith.constant 0 : i32
    return %c0_i32, %c0_i32_0 : i32, i32
  }
  func.func @transform_1(%arg0: i32, %arg1: i32) -> (i32, i32) {
    %c0_i32 = arith.constant 0 : i32
    %c0_i32_0 = arith.constant 0 : i32
    %c0_i32_1 = arith.constant 0 : i32
    return %c0_i32, %c0_i32_0 : i32, i32
  }
  func.func @transform_2(%arg0: i32, %arg1: i32) -> (i32, i32) {
    %c2_i32 = arith.constant 2 : i32
    %0 = arith.muli %arg0, %c2_i32 : i32
    %1 = arith.addi %0, %arg1 : i32
    %c0_i32 = arith.constant 0 : i32
    %c0_i32_0 = arith.constant 0 : i32
    return %1, %c0_i32 : i32, i32
  }
  func.func @transform_3(%arg0: i32, %arg1: i32) -> (i32, i32, i32) {
    %c0_i32 = arith.constant 0 : i32
    %c0_i32_0 = arith.constant 0 : i32
    %c0_i32_1 = arith.constant 0 : i32
    return %arg0, %c0_i32, %c0_i32_0 : i32, i32, i32
  }
  func.func @transform_4(%arg0: i32, %arg1: i32) -> (i32, i32, i32) {
    %c0_i32 = arith.constant 0 : i32
    %c0_i32_0 = arith.constant 0 : i32
    %c0_i32_1 = arith.constant 0 : i32
    return %arg0, %c0_i32, %c0_i32_0 : i32, i32, i32
  }
}

</mosaic_0001>

<llo_original>
// kernel: tpu_custom_call.1
$region0: #{tpu_custom_call.1}
  #allocation0 [shape = 'u32[]', space=smem, size = 0x4, offset = 0x4, fixed_abs, tag = 'smem constant byte address 0x4 - core index']
  #allocation1 [shape = 'u32[72,128]{1,0:T(1,128)}', space=vmem, size = 0x9000, scoped, tag = 'internal scratch']
  #allocation2 [shape = 'bf16[8,128]{1,0:T(8,128)(2,1)}', space=vmem, size = 0x800, scoped, tag = 'scratch operand']
  #allocation3 [shape = 'f32[8,1]{1,0:T(8,128)}', space=vmem, size = 0x1000, scoped, tag = 'scratch operand']
  #allocation4 [shape = 'f32[8,1]{1,0:T(8,128)}', space=vmem, size = 0x1000, scoped, tag = 'scratch operand']
  #allocation5 [shape = 'f32[8,1]{1,0:T(8,128)}', space=vmem, size = 0x1000, scoped, tag = 'scratch operand']
  %s0 = inlined_call_operand.hbm [shape: f32[8,128], index: 0, kind: input, shape index: {}]
  %s1 = inlined_call_operand.hbm [shape: f32[8,128], index: 1, kind: input, shape index: {}]
  %s2 = inlined_call_operand.hbm [shape: bf16[1024,128], index: 2, kind: input, shape index: {}]
  %s3 = inlined_call_operand.vmem [shape: f32[2,8,1], index: 3, kind: output, shape index: {0}]
  %s4 = inlined_call_operand.vmem [shape: f32[2,8,1], index: 4, kind: output, shape index: {1}]
  %5 = xla_tuple %s3, %s4
  %s6 = sld [smem:[#allocation0]]
  $region73: #{tpu_custom_call.1} parent=0
    _
  %s8 = ssub.s32 1, %s6
  %s9 = scalar_select 0, %s8, %s6
  $region1: #{tpu_custom_call.1} parent=0
    #allocation6 [shape = 'u8[4096]{0}', space=vmem, size = 0x1000, scoped, tag = 'input window, operand 0, single buffered']
    #allocation7 [shape = 's32[2]{0}', space=sflag, size = 0x8, scoped, tag = 'scoped memory for tpu_custom_call.1']
    #allocation8 [shape = 'u8[4096]{0}', space=vmem, size = 0x1000, scoped, tag = 'input window, operand 1, single buffered']
    #allocation9 [shape = 's32[1]{0}', space=sflag, size = 0x4, scoped, tag = 'scoped memory for tpu_custom_call.1']
    #allocation10 [shape = 'u8[131072]{0}', space=vmem, size = 0x20000, scoped, tag = 'input window, operand 2']
    %10 = vsyncpa [#allocation7], 0
    %11 = vsyncpa [#allocation9], 0
    loop: start=0, step=1, limit=6
    $region2: #{tpu_custom_call.1} parent=1 // loop_pre_header
      _
    $region3: #{tpu_custom_call.1} parent=1 // loop_header
      %s13 = sphi 0, %s17
      %p14 = scmp.ge.s32.totalorder %s13, 6
      %s20 = sphi 0, %s32
      %s21 = sphi 0, %s28
      %s22 = sphi 0, %s20
      %s23 = sphi 0, %s21
      %s24 = sphi 0, %s22
      %s25 = sphi 0, %s23
      %s33 = sphi 0, %s33
      %s35 = sphi 0, %s33
      %s36 = sphi 0, %s35
      %s50 = sphi 0, %s36
      %s54 = sphi 0, %s54
      %s56 = sphi 0, %s54
      %s57 = sphi 0, %s56
      %s71 = sphi 0, %s57
      %s81 = sphi 0, %s83
      %s84 = sphi 0, %s81
      %s85 = sphi 0, %s84
      %s101 = sphi 0, %s85
      %s107 = sphi 0, %s109
      %s110 = sphi 0, %s107
      %s111 = sphi 0, %s110
      %s127 = sphi 0, %s111
      %s133 = sphi 0, %s135
      %s136 = sphi 0, %s133
      %s137 = sphi 0, %s136
      %s153 = sphi 0, %s137
    $region4: #{tpu_custom_call.1} parent=1 // loop_header_branch
      %16 = sbr.rel (%p14) target = $region8
    $region5: #{tpu_custom_call.1} parent=1 // loop_body
      %s18 = ssub.s32 %s13, 1
      %s19 = ssub.s32 %s13, 2
      %s26 = sadd.s32 1, %s21
      %p27 = scmp.ge.s32.totalorder %s26, 2
      %s28 = scalar_select %p27, 0, %s26
      %s29 = sadd.s32 1, %s20
      %s30 = scalar_select %p27, %s29, %s20
      %p31 = scmp.ge.s32.totalorder %s30, 2
      %s32 = scalar_select %p31, 0, %s30
      %s34 = sadd.s32 %s33, 1
      %p37 = scmp.eq.s32.totalorder %s13, 3
      %p38 = scmp.ne.s32.totalorder %s33, %s35
      %p39 = scmp.eq.s32.totalorder %s13, 0
      %p40 = por %p38, %p39
      %p41 = scmp.ne.s32.totalorder %s33, %s35
      %p42 = scmp.eq.s32.totalorder %s18, 3
      %p43 = por %p41, %p42
      %p44 = scmp.ne.s32.totalorder %s35, %s36
      %p45 = scmp.eq.s32.totalorder %s18, 0
      %p46 = por %p44, %p45
      %p47 = scmp.ne.s32.totalorder %s35, %s36
      %p48 = scmp.eq.s32.totalorder %s19, 3
      %p49 = por %p47, %p48
      %p51 = scmp.ne.s32.totalorder %s36, %s50
      %p52 = scmp.eq.s32.totalorder %s19, 0
      %p53 = por %p51, %p52
      %s55 = sadd.s32 %s54, 1
      %p58 = scmp.eq.s32.totalorder %s13, 3
      %p59 = scmp.ne.s32.totalorder %s54, %s56
      %p60 = scmp.eq.s32.totalorder %s13, 0
      %p61 = por %p59, %p60
      %p62 = scmp.ne.s32.totalorder %s54, %s56
      %p63 = scmp.eq.s32.totalorder %s18, 3
      %p64 = por %p62, %p63
      %p65 = scmp.ne.s32.totalorder %s56, %s57
      %p66 = scmp.eq.s32.totalorder %s18, 0
      %p67 = por %p65, %p66
      %p68 = scmp.ne.s32.totalorder %s56, %s57
      %p69 = scmp.eq.s32.totalorder %s19, 3
      %p70 = por %p68, %p69
      %p72 = scmp.ne.s32.totalorder %s57, %s71
      %p73 = scmp.eq.s32.totalorder %s19, 0
      %p74 = por %p72, %p73
      %s75 = smul.u32 %s20, 2
      %s76 = sadd.s32 %s75, %s21
      %s77 = smul.u32 %s32, 2
      %s78 = sadd.s32 %s77, %s28
      %s79 = ssub.s32 %s76, %s78
      %p80 = scmp.eq.s32.totalorder %s79, 0
      %s82 = sadd.s32 %s81, 1
      %s83 = scalar_select %p80, %s81, %s82
      %p86 = pneg %p80
      %p87 = scmp.eq.s32.totalorder %s13, 3
      %p88 = por %p86, %p87
      %p89 = scmp.ne.s32.totalorder %s81, %s84
      %p90 = scmp.eq.s32.totalorder %s13, 0
      %p91 = por %p89, %p90
      %p92 = scmp.ne.s32.totalorder %s81, %s84
      %p93 = scmp.eq.s32.totalorder %s18, 3
      %p94 = por %p92, %p93
      %p95 = scmp.ne.s32.totalorder %s84, %s85
      %p96 = scmp.eq.s32.totalorder %s18, 0
      %p97 = por %p95, %p96
      %p98 = scmp.ne.s32.totalorder %s84, %s85
      %p99 = scmp.eq.s32.totalorder %s19, 3
      %p100 = por %p98, %p99
      %p102 = scmp.ne.s32.totalorder %s85, %s101
      %p103 = scmp.eq.s32.totalorder %s19, 0
      %p104 = por %p102, %p103
      %s105 = ssub.s32 %s20, %s32
      %p106 = scmp.eq.s32.totalorder %s105, 0
      %s108 = sadd.s32 %s107, 1
      %s109 = scalar_select %p106, %s107, %s108
      %p112 = pneg %p106
      %p113 = scmp.eq.s32.totalorder %s13, 3
      %p114 = por %p112, %p113
      %p115 = scmp.ne.s32.totalorder %s107, %s110
      %p116 = scmp.eq.s32.totalorder %s13, 0
      %p117 = por %p115, %p116
      %p118 = scmp.ne.s32.totalorder %s107, %s110
      %p119 = scmp.eq.s32.totalorder %s18, 3
      %p120 = por %p118, %p119
      %p121 = scmp.ne.s32.totalorder %s110, %s111
      %p122 = scmp.eq.s32.totalorder %s18, 0
      %p123 = por %p121, %p122
      %p124 = scmp.ne.s32.totalorder %s110, %s111
      %p125 = scmp.eq.s32.totalorder %s19, 3
      %p126 = por %p124, %p125
      %p128 = scmp.ne.s32.totalorder %s111, %s127
      %p129 = scmp.eq.s32.totalorder %s19, 0
      %p130 = por %p128, %p129
      %s131 = ssub.s32 %s20, %s32
      %p132 = scmp.eq.s32.totalorder %s131, 0
      %s134 = sadd.s32 %s133, 1
      %s135 = scalar_select %p132, %s133, %s134
      %p138 = pneg %p132
      %p139 = scmp.eq.s32.totalorder %s13, 3
      %p140 = por %p138, %p139
      %p141 = scmp.ne.s32.totalorder %s133, %s136
      %p142 = scmp.eq.s32.totalorder %s13, 0
      %p143 = por %p141, %p142
      %p144 = scmp.ne.s32.totalorder %s133, %s136
      %p145 = scmp.eq.s32.totalorder %s18, 3
      %p146 = por %p144, %p145
      %p147 = scmp.ne.s32.totalorder %s136, %s137
      %p148 = scmp.eq.s32.totalorder %s18, 0
      %p149 = por %p147, %p148
      %p150 = scmp.ne.s32.totalorder %s136, %s137
      %p151 = scmp.eq.s32.totalorder %s19, 3
      %p152 = por %p150, %p151
      %p154 = scmp.ne.s32.totalorder %s137, %s153
      %p155 = scmp.eq.s32.totalorder %s19, 0
      %p156 = por %p154, %p155
      %p157 = scmp.le.s32.totalorder 1, %s13
      %p158 = scmp.lt.s32.totalorder %s13, 5
      %p159 = pnand %p157, %p158
      %p160 = pneg %p159
      // Predicated region
      $region9: #{tpu_custom_call.1} parent=5 // pred_check
        _
      $region10: #{tpu_custom_call.1} parent=5 // pred_check_branch
        %162 = sbr.rel (%p159) target = $region12
      $region11: #{tpu_custom_call.1} parent=5 // pred_region
        %s163 = ssub.s32 %s13, 1
        // Predicated region
        $region13: #{tpu_custom_call.1} parent=11 // pred_check
          %p164 = pneg %p46
        $region14: #{tpu_custom_call.1} parent=11 // pred_check_branch
          %166 = sbr.rel (%p164) target = $region16
        $region15: #{tpu_custom_call.1} parent=11 // pred_region
          %168 = vsyncadd [#allocation7], 0
          %s170 = sshll.u32 %s0, 4
          %s171 = int_to_ptr.hbm [resolvable:$true] %s170
          %s172 = sshll.u32 [#allocation6], 4
          %s173 = int_to_ptr.vmem [resolvable:$true] %s172
          %175 = dma.hbm_to_vmem [thread:$0]  %s171, 128, %s173, [#allocation7]
        $region16: #{tpu_custom_call.1} parent=11 // pred_fallthru
          _
        // Predicated region
        $region17: #{tpu_custom_call.1} parent=11 // pred_check
          %p176 = pneg %p67
        $region18: #{tpu_custom_call.1} parent=11 // pred_check_branch
          %178 = sbr.rel (%p176) target = $region20
        $region19: #{tpu_custom_call.1} parent=11 // pred_region
          %180 = vsyncadd [#allocation9], 0
          %s182 = sshll.u32 %s1, 4
          %s183 = int_to_ptr.hbm [resolvable:$true] %s182
          %s184 = sshll.u32 [#allocation8], 4
          %s185 = int_to_ptr.vmem [resolvable:$true] %s184
          %187 = dma.hbm_to_vmem [thread:$0]  %s183, 128, %s185, [#allocation9]
        $region20: #{tpu_custom_call.1} parent=11 // pred_fallthru
          _
      $region12: #{tpu_custom_call.1} parent=5 // pred_fallthru
        _
      %p188 = scmp.lt.s32.totalorder %s13, 4
      // Predicated region
      $region21: #{tpu_custom_call.1} parent=5 // pred_check
        %p189 = pneg %p188
      $region22: #{tpu_custom_call.1} parent=5 // pred_check_branch
        %191 = sbr.rel (%p189) target = $region24
      $region23: #{tpu_custom_call.1} parent=5 // pred_region
        // Predicated region
        $region25: #{tpu_custom_call.1} parent=23 // pred_check
          %p192 = pneg %p91
        $region26: #{tpu_custom_call.1} parent=23 // pred_check_branch
          %194 = sbr.rel (%p192) target = $region28
        $region27: #{tpu_custom_call.1} parent=23 // pred_region
          %s195 = sand.u32 %s13, 1
          %s196 = scalar_lea.sflag [#allocation7], %s195
          %s197 = sand.u32 %s81, 1
          %s198 = smul.addr %s197, 128
          %s199 = scalar_lea.vmem [#allocation10], %s198
          %s200 = smul.u32 %s20, 2
          %s201 = sadd.s32 %s200, %s21
          %s202 = smul.u32 32, %s201
          %204 = vsyncadd %s196, 0
          %s205 = smul.addr %s202, 4
          %s206 = scalar_lea.hbm %s2, %s205
          %s207 = sshll.u32 %s206, 4
          %s208 = int_to_ptr.hbm [resolvable:$true] %s207
          %s209 = sshll.u32 %s199, 4
          %s210 = int_to_ptr.vmem [resolvable:$true] %s209
          %215 = dma.hbm_to_vmem [thread:$0]  %s208, 2048, %s210, %s196, 64, 64, 4
        $region28: #{tpu_custom_call.1} parent=23 // pred_fallthru
          _
      $region24: #{tpu_custom_call.1} parent=5 // pred_fallthru
        _
      %p216 = scmp.le.s32.totalorder 1, %s13
      %p217 = scmp.lt.s32.totalorder %s13, 5
      %p218 = pnand %p216, %p217
      %p219 = pneg %p218
      // Predicated region
      $region29: #{tpu_custom_call.1} parent=5 // pred_check
        _
      $region30: #{tpu_custom_call.1} parent=5 // pred_check_branch
        %221 = sbr.rel (%p218) target = $region32
      $region31: #{tpu_custom_call.1} parent=5 // pred_region
        %s222 = ssub.s32 %s13, 1
        // Predicated region
        $region33: #{tpu_custom_call.1} parent=31 // pred_check
          %p223 = pneg %p46
        $region34: #{tpu_custom_call.1} parent=31 // pred_check_branch
          %225 = sbr.rel (%p223) target = $region36
        $region35: #{tpu_custom_call.1} parent=31 // pred_region
          %227 = dma.done [#allocation7], 128
        $region36: #{tpu_custom_call.1} parent=31 // pred_fallthru
          _
        // Predicated region
        $region37: #{tpu_custom_call.1} parent=31 // pred_check
          %p228 = pneg %p67
        $region38: #{tpu_custom_call.1} parent=31 // pred_check_branch
          %230 = sbr.rel (%p228) target = $region40
        $region39: #{tpu_custom_call.1} parent=31 // pred_region
          %232 = dma.done [#allocation9], 128
        $region40: #{tpu_custom_call.1} parent=31 // pred_fallthru
          _
        %s233 = sand.u32 %s18, 1
        %s234 = scalar_lea.sflag [#allocation7], %s233
        %s235 = sand.u32 %s84, 1
        %s236 = smul.addr %s235, 128
        %s237 = scalar_lea.vmem [#allocation10], %s236
        // Predicated region
        $region41: #{tpu_custom_call.1} parent=31 // pred_check
          %p238 = pneg %p97
        $region42: #{tpu_custom_call.1} parent=31 // pred_check_branch
          %240 = sbr.rel (%p238) target = $region44
        $region43: #{tpu_custom_call.1} parent=31 // pred_region
          %242 = dma.done %s234, 2048
        $region44: #{tpu_custom_call.1} parent=31 // pred_fallthru
          _
        %p243 = pneg %p46
        %p244 = pneg %p43
        %p245 = pneg %p67
        %p246 = pneg %p64
        %s247 = sand.u32 %s18, 1
        %s248 = scalar_lea.sflag [#allocation7], %s247
        %s249 = sand.u32 %s84, 1
        %s250 = smul.addr %s249, 128
        %s251 = scalar_lea.vmem [#allocation10], %s250
        %p252 = pneg %p97
        %p253 = pneg %p94
        %p254 = pneg %p123
        %p255 = pneg %p120
        %p256 = scmp.lt.s32.totalorder %s22, 1
        %s257 = scalar_select %p256, %s22, 1
        %s258 = smul.addr %s257, 8
        %s259 = scalar_lea.vmem %s3, %s258
        %p260 = pneg %p149
        %p261 = pneg %p146
        %p262 = scmp.lt.s32.totalorder %s22, 1
        %s263 = scalar_select %p262, %s22, 1
        %s264 = smul.addr %s263, 8
        %s265 = scalar_lea.vmem %s4, %s264
        %s266 = smul.u32 %s22, 2
        %s267 = sadd.s32 %s266, %s23
        %s268 = smul.u32 32, %s267
        %p269 = scmp.lt.s32.totalorder %s22, 1
        %s270 = scalar_select %p269, %s22, 1
        %s271 = smul.addr %s270, 8
        %s272 = scalar_lea.vmem %s3, %s271
        %p273 = scmp.lt.s32.totalorder %s22, 1
        %s274 = scalar_select %p273, %s22, 1
        %s275 = smul.addr %s274, 8
        %s276 = scalar_lea.vmem %s4, %s275
        %p277 = scmp.eq.s32.totalorder %s23, 0
        // Predicated region
        $region45: #{tpu_custom_call.1} parent=31 // pred_check
          %p278 = pneg %p277
        $region46: #{tpu_custom_call.1} parent=31 // pred_check_branch
          %280 = sbr.rel (%p278) target = $region48
        $region47: #{tpu_custom_call.1} parent=31 // pred_region
          %v281 = vld [vmem:[#allocation6] sm:$0xff]
          %v282 = vld [vmem:[#allocation8] sm:$0xff]
          %v283 = vmul.f32 %v281, %v281
          %284 = vadd.xlane.f32.xlu0 %v283
          %v285 = vpop.xlane.xlu0 %284
          %v286 = vmax.f32 %v285, 1e-24
          %v287 = vrsqrt.pop %v286
          %v288 = vmul.f32 %v287, %v286
          %v289 = vmul.f32 %v288, %v287
          %v290 = vmul.f32 0.5, %v289
          %v291 = vsub.f32 1.5, %v290
          %v292 = vmul.f32 %v287, %v291
          %vm293 = vweird.f32 %v286
          %vm294 = vweird.f32 %v287
          %vm295 = vmor %vm293, %vm294
          %v296 = vsel %vm295, %v287, %v292
          %v297 = vmul.f32 %v281, %v296
          %v298 = vmul.f32 %v282, %v282
          %299 = vadd.xlane.f32.xlu0 %v298
          %v300 = vpop.xlane.xlu0 %299
          %v301 = vmax.f32 %v300, 1e-24
          %v302 = vrsqrt.pop %v301
          %v303 = vmul.f32 %v302, %v301
          %v304 = vmul.f32 %v303, %v302
          %v305 = vmul.f32 0.5, %v304
          %v306 = vsub.f32 1.5, %v305
          %v307 = vmul.f32 %v302, %v306
          %vm308 = vweird.f32 %v301
          %vm309 = vweird.f32 %v302
          %vm310 = vmor %vm308, %vm309
          %v311 = vsel %vm310, %v302, %v307
          %v312 = vmul.f32 %v282, %v311
          %v313 = vmul.f32 %v297, 2.0
          %v314 = vmul.f32 %v313, %v312
          %315 = vadd.xlane.f32.xlu0 %v314
          %v316 = vpop.xlane.xlu0 %315
          %vm317 = vcmask 7168
          %318 = vst.msk [vmem:[#allocation3] sm:$0xff] %vm317, %v316
          %v319 = vpack.c.bf16 %v313, %v313
          %320 = vst [vmem:[#allocation2] sm:$0xf] %v319
          %321 = vst.msk [vmem:[#allocation4] sm:$0xff] %vm317, -1e+30
          %322 = vst.msk [vmem:[#allocation5] sm:$0xff] %vm317, 0.0
        $region48: #{tpu_custom_call.1} parent=31 // pred_fallthru
          _
        %v323 = vld [vmem:[#allocation2] sm:$0xf]
        %v324 = vld [vmem:[%s237] sm:$0xf]
        %v325 = vld [vmem:[%s237 + $0x4] sm:$0xf]
        %v326 = vld [vmem:[%s237 + $0x8] sm:$0xf]
        %v327 = vld [vmem:[%s237 + $0xc] sm:$0xf]
        %v328 = vld [vmem:[%s237 + $0x10] sm:$0xf]
        %v329 = vld [vmem:[%s237 + $0x14] sm:$0xf]
        %v330 = vld [vmem:[%s237 + $0x18] sm:$0xf]
        %v331 = vld [vmem:[%s237 + $0x1c] sm:$0xf]
        %v332 = vld [vmem:[%s237 + $0x20] sm:$0xf]
        %v333 = vld [vmem:[%s237 + $0x24] sm:$0xf]
        %v334 = vld [vmem:[%s237 + $0x28] sm:$0xf]
        %v335 = vld [vmem:[%s237 + $0x2c] sm:$0xf]
        %v336 = vld [vmem:[%s237 + $0x30] sm:$0xf]
        %v337 = vld [vmem:[%s237 + $0x34] sm:$0xf]
        %v338 = vld [vmem:[%s237 + $0x38] sm:$0xf]
        %v339 = vld [vmem:[%s237 + $0x3c] sm:$0xf]
        %v340 = vld [vmem:[%s237 + $0x40] sm:$0xf]
        %v341 = vld [vmem:[%s237 + $0x44] sm:$0xf]
        %v342 = vld [vmem:[%s237 + $0x48] sm:$0xf]
        %v343 = vld [vmem:[%s237 + $0x4c] sm:$0xf]
        %v344 = vld [vmem:[%s237 + $0x50] sm:$0xf]
        %v345 = vld [vmem:[%s237 + $0x54] sm:$0xf]
        %v346 = vld [vmem:[%s237 + $0x58] sm:$0xf]
        %v347 = vld [vmem:[%s237 + $0x5c] sm:$0xf]
        %v348 = vld [vmem:[%s237 + $0x60] sm:$0xf]
        %v349 = vld [vmem:[%s237 + $0x64] sm:$0xf]
        %v350 = vld [vmem:[%s237 + $0x68] sm:$0xf]
        %v351 = vld [vmem:[%s237 + $0x6c] sm:$0xf]
        %v352 = vld [vmem:[%s237 + $0x70] sm:$0xf]
        %v353 = vld [vmem:[%s237 + $0x74] sm:$0xf]
        %v354 = vld [vmem:[%s237 + $0x78] sm:$0xf]
        %v355 = vld [vmem:[%s237 + $0x7c] sm:$0xf]
        %v388 = vunpack.c.l.b16 %v324
        %v389 = vunpack.c.l.b16 %v325
        %v390 = vunpack.c.l.b16 %v326
        %v391 = vunpack.c.l.b16 %v327
        %v392 = vunpack.c.l.b16 %v328
        %v393 = vunpack.c.l.b16 %v329
        %v394 = vunpack.c.l.b16 %v330
        %v395 = vunpack.c.l.b16 %v331
        %v396 = vunpack.c.l.b16 %v332
        %v397 = vunpack.c.l.b16 %v333
        %v398 = vunpack.c.l.b16 %v334
        %v399 = vunpack.c.l.b16 %v335
        %v400 = vunpack.c.l.b16 %v336
        %v401 = vunpack.c.l.b16 %v337
        %v402 = vunpack.c.l.b16 %v338
        %v403 = vunpack.c.l.b16 %v339
        %v404 = vunpack.c.l.b16 %v340
        %v405 = vunpack.c.l.b16 %v341
        %v406 = vunpack.c.l.b16 %v342
        %v407 = vunpack.c.l.b16 %v343
        %v408 = vunpack.c.l.b16 %v344
        %v409 = vunpack.c.l.b16 %v345
        %v410 = vunpack.c.l.b16 %v346
        %v411 = vunpack.c.l.b16 %v347
        %v412 = vunpack.c.l.b16 %v348
        %v413 = vunpack.c.l.b16 %v349
        %v414 = vunpack.c.l.b16 %v350
        %v415 = vunpack.c.l.b16 %v351
        %v416 = vunpack.c.l.b16 %v352
        %v417 = vunpack.c.l.b16 %v353
        %v418 = vunpack.c.l.b16 %v354
        %v419 = vunpack.c.l.b16 %v355
        %v420 = vpack.c.b16 %v389, %v388
        %v421 = vpack.c.b16 %v391, %v390
        %v422 = vpack.c.b16 %v393, %v392
        %v423 = vpack.c.b16 %v395, %v394
        %v424 = vpack.c.b16 %v397, %v396
        %v425 = vpack.c.b16 %v399, %v398
        %v426 = vpack.c.b16 %v401, %v400
        %v427 = vpack.c.b16 %v403, %v402
        %v428 = vpack.c.b16 %v405, %v404
        %v429 = vpack.c.b16 %v407, %v406
        %v430 = vpack.c.b16 %v409, %v408
        %v431 = vpack.c.b16 %v411, %v410
        %v432 = vpack.c.b16 %v413, %v412
        %v433 = vpack.c.b16 %v415, %v414
        %v434 = vpack.c.b16 %v417, %v416
        %v435 = vpack.c.b16 %v419, %v418
        %452 = vmatpush.bf16.xpose.msra.mxu0 %v427
        %453 = vmatpush.bf16.xpose.msra.mxu0 %v426
        %454 = vmatpush.bf16.xpose.msra.mxu0 %v425
        %455 = vmatpush.bf16.xpose.msra.mxu0 %v424
        %456 = vmatpush.bf16.xpose.msra.mxu0 %v423
        %457 = vmatpush.bf16.xpose.msra.mxu0 %v422
        %458 = vmatpush.bf16.xpose.msra.mxu0 %v421
        %459 = vmatpush.bf16.xpose.msra.mxu0 %v420
        %460 = vmatmul.bf16.gmra.mxu0 %v323
        %v461 = vpop.f32.mrf.mxu0
        %v462 = vadd.f32 0.0, %v461
        %v463 = vpop.f32.mrf.mxu0
        %464 = vdwg.mxu0
        %465 = vmatpush.bf16.xpose.msra.mxu0 %v435
        %466 = vmatpush.bf16.xpose.msra.mxu0 %v434
        %467 = vmatpush.bf16.xpose.msra.mxu0 %v433
        %468 = vmatpush.bf16.xpose.msra.mxu0 %v432
        %469 = vmatpush.bf16.xpose.msra.mxu0 %v431
        %470 = vmatpush.bf16.xpose.msra.mxu0 %v430
        %471 = vmatpush.bf16.xpose.msra.mxu0 %v429
        %472 = vmatpush.bf16.xpose.msra.mxu0 %v428
        %473 = vmatmul.bf16.gmra.mxu0 %v323
        %v474 = vpop.f32.mrf.mxu0
        %v475 = vadd.f32 0.0, %v474
        %v476 = vpop.f32.mrf.mxu0
        %477 = vdwg.mxu0
        %v478 = vld [vmem:[#allocation4] sm:$0xff]
        %v479 = vmax.f32 %v462, %v475
        %480 = vmax.xlane.f32.xlu0 %v479
        %v481 = vpop.xlane.xlu0 %480
        %v482 = vmax.f32 %v478, %v481
        %v483 = vsub.f32 %v478, %v482
        %v484 = vmul.f32 %v483, 1.442695
        %v485 = vpow.pop %v484
        %v486 = vld [vmem:[#allocation5] sm:$0xff]
        %v487 = vmul.f32 %v485, %v486
        %489 = vset.pattern.permute.xlu0 0
        %490 = vperm.xlu0 %489, %v482
        %v491 = vpop.permute.xlu0 %490
        %v493 = vsub.f32 %v462, %v491
        %v494 = vsub.f32 %v475, %v491
        %v495 = vmul.f32 %v493, 1.442695
        %v496 = vpow.pop %v495
        %v497 = vmul.f32 %v494, 1.442695
        %v498 = vpow.pop %v497
        %v499 = vadd.f32 %v496, %v498
        %500 = vadd.xlane.f32.xlu0 %v499
        %v501 = vpop.xlane.xlu0 %500
        %v502 = vadd.f32 %v487, %v501
        %vm503 = vcmask 7168
        %504 = vst.msk [vmem:[#allocation5] sm:$0xff] %vm503, %v502
        %505 = vst.msk [vmem:[#allocation4] sm:$0xff] %vm503, %v482
        %p506 = scmp.eq.s32.totalorder %s23, 1
        // Predicated region
        $region49: #{tpu_custom_call.1} parent=31 // pred_check
          %p507 = pneg %p506
        $region50: #{tpu_custom_call.1} parent=31 // pred_check_branch
          %509 = sbr.rel (%p507) target = $region52
        $region51: #{tpu_custom_call.1} parent=31 // pred_region
          %v510 = vld [vmem:[#allocation3] sm:$0xff]
          %511 = vst.msk [vmem:[%s272] sm:$0xff] %vm503, %v510
          %v512 = vld [vmem:[#allocation4] sm:$0xff]
          %v513 = vld [vmem:[#allocation5] sm:$0xff]
          %v514 = vlog2.pop %v513
          %v515 = vmul.f32 %v514, 0.6931472
          %v516 = vadd.f32 %v512, %v515
          %517 = vst.msk [vmem:[%s276] sm:$0xff] %vm503, %v516
        $region52: #{tpu_custom_call.1} parent=31 // pred_fallthru
          _
        %p518 = scmp.lt.s32.totalorder %s22, 1
        %s519 = scalar_select %p518, %s22, 1
        %s520 = smul.addr %s519, 8
        %s521 = scalar_lea.vmem %s3, %s520
        %p522 = scmp.lt.s32.totalorder %s22, 1
        %s523 = scalar_select %p522, %s22, 1
        %s524 = smul.addr %s523, 8
        %s525 = scalar_lea.vmem %s4, %s524
        // Predicated region
        $region53: #{tpu_custom_call.1} parent=31 // pred_check
          %p526 = pneg %p120
        $region54: #{tpu_custom_call.1} parent=31 // pred_check_branch
          %528 = sbr.rel (%p526) target = $region56
        $region55: #{tpu_custom_call.1} parent=31 // pred_region
          _
        $region56: #{tpu_custom_call.1} parent=31 // pred_fallthru
          _
        // Predicated region
        $region57: #{tpu_custom_call.1} parent=31 // pred_check
          %p529 = pneg %p146
        $region58: #{tpu_custom_call.1} parent=31 // pred_check_branch
          %531 = sbr.rel (%p529) target = $region60
        $region59: #{tpu_custom_call.1} parent=31 // pred_region
          _
        $region60: #{tpu_custom_call.1} parent=31 // pred_fallthru
          _
      $region32: #{tpu_custom_call.1} parent=5 // pred_fallthru
        _
      %p532 = scmp.le.s32.totalorder 2, %s13
      // Predicated region
      $region61: #{tpu_custom_call.1} parent=5 // pred_check
        %p533 = pneg %p532
      $region62: #{tpu_custom_call.1} parent=5 // pred_check_branch
        %535 = sbr.rel (%p533) target = $region64
      $region63: #{tpu_custom_call.1} parent=5 // pred_region
        %s536 = ssub.s32 %s13, 2
        // Predicated region
        $region65: #{tpu_custom_call.1} parent=63 // pred_check
          %p537 = pneg %p126
        $region66: #{tpu_custom_call.1} parent=63 // pred_check_branch
          %539 = sbr.rel (%p537) target = $region68
        $region67: #{tpu_custom_call.1} parent=63 // pred_region
          %p540 = scmp.lt.s32.totalorder %s24, 1
          %s541 = scalar_select %p540, %s24, 1
          %s542 = smul.addr %s541, 8
          %s543 = scalar_lea.vmem %s3, %s542
        $region68: #{tpu_custom_call.1} parent=63 // pred_fallthru
          _
        // Predicated region
        $region69: #{tpu_custom_call.1} parent=63 // pred_check
          %p544 = pneg %p152
        $region70: #{tpu_custom_call.1} parent=63 // pred_check_branch
          %546 = sbr.rel (%p544) target = $region72
        $region71: #{tpu_custom_call.1} parent=63 // pred_region
          %p547 = scmp.lt.s32.totalorder %s24, 1
          %s548 = scalar_select %p547, %s24, 1
          %s549 = smul.addr %s548, 8
          %s550 = scalar_lea.vmem %s4, %s549
        $region72: #{tpu_custom_call.1} parent=63 // pred_fallthru
          _
      $region64: #{tpu_custom_call.1} parent=5 // pred_fallthru
        _
    $region6: #{tpu_custom_call.1} parent=1 // loop_footer
      %s17 = sadd.s32 1, %s13
    $region7: #{tpu_custom_call.1} parent=1 // loop_footer_branch
      %12 = sbr.rel target = $region3
    $region8: #{tpu_custom_call.1} parent=1 // loop_exit
      _
    %551 = vsyncpa [#allocation7], 1
    %s552 = scalar_lea.sflag [#allocation7], 1
    %553 = vsyncpa %s552, 1
    %554 = vsyncpa [#allocation9], 1

</llo_original>
